<compile_context>
chip_gen: v5e
topology: v5e:2x2
jax: 0.10.0
libtpu: 0.0.40
codegen_flags: <defaults>
</compile_context>

<pallas_src>
import jax
import jax.numpy as jnp
from jax.experimental import pallas as pl
from jax.experimental.pallas import tpu as pltpu


_LANE = 128      # TPU lane width
_MAX_BM = 256    # batch-tile cap (lanes) -> ~14-vreg hidden tile, no spills


def _round_up(x, m):
    return ((x + m - 1) // m) * m


def _pick_bm(b_pad):
    """Largest multiple of 128 that is <= _MAX_BM and divides b_pad."""
    bm = _MAX_BM
    while b_pad % bm != 0:
        bm -= _LANE
    return bm


# ----------------------------------------------------------------------------
# Kernel
# ----------------------------------------------------------------------------
def _odefunc_kernel(yt_ref, w1_ref, b1_ref, w2_ref, b2_ref, o_ref):
    """One batch tile, batch on lanes.

    yt_ref: (2, bm)   y^T tile            (batch on lanes)
    w1_ref: (H, 2)    first-layer weight  (torch [out, in] orientation)
    b1_ref: (H, 1)    first-layer bias
    w2_ref: (H, 2)    second-layer weight as [in, out]
    b2_ref: (2, 1)    second-layer bias
    o_ref : (2, bm)   output tile (out^T, batch on lanes)
    """
    y = yt_ref[...].astype(jnp.float32)                     # (2, bm)
    x = y * y * y                                           # y ** 3, VPU

    w1 = w1_ref[...].astype(jnp.float32)                    # (H, 2)
    b1 = b1_ref[...].astype(jnp.float32)                    # (H, 1)
    # Layer 1: h[H, bm] = W1[H, 2] @ x[2, bm] + b1  -> two VPU broadcast-FMAs
    # (K = 2, skip the MXU entirely), then tanh on the EUP.
    h = jnp.tanh(w1[:, 0:1] * x[0:1, :] + w1[:, 1:2] * x[1:2, :] + b1)

    w2 = w2_ref[...].astype(jnp.float32)                    # (H, 2)
    b2 = b2_ref[...].astype(jnp.float32)                    # (2, 1)
    # Layer 2: out[c, bm] = sum_H (W2[:, c] * h) + b2[c]
    # VPU multiply + XLU sublane reduce per channel; the two rows are written
    # directly (no concatenate / sublane interleave), and the second product
    # temp only goes live after the first has been reduced.
    o_ref[0:1, :] = (
        jnp.sum(w2[:, 0:1] * h, axis=0, keepdims=True) + b2[0:1, :]
    ).astype(o_ref.dtype)
    o_ref[1:2, :] = (
        jnp.sum(w2[:, 1:2] * h, axis=0, keepdims=True) + b2[1:2, :]
    ).astype(o_ref.dtype)


# ----------------------------------------------------------------------------
# Lane-dense RHS (use this inside an ODE-solver loop; state stays (2, B_pad))
# ----------------------------------------------------------------------------
def odefunc_rhs_lane_dense(yt, w1, b1, w2, b2):
    """dy/dt in lane-dense layout.

    yt: (2, B_pad) with B_pad a multiple of 128.  Returns (2, B_pad).
    """
    two, b_pad = yt.shape
    assert two == 2 and b_pad % _LANE == 0
    H = w1.shape[0]
    bm = _pick_bm(b_pad)
    grid = (b_pad // bm,)

    # Advisory cost hint so XLA schedules this tiny call tightly inside the
    # solver loop (launch/HBM bound, not compute bound).
    cost = pl.CostEstimate(
        flops=int(b_pad) * (4 + 9 * H + 2),
        transcendentals=int(b_pad) * H,
        bytes_accessed=int(2 * yt.size) * 4
        + int(w1.size + b1.size + w2.size + b2.size) * 4,
    )

    return pl.pallas_call(
        _odefunc_kernel,
        out_shape=jax.ShapeDtypeStruct((2, b_pad), yt.dtype),
        grid_spec=pltpu.PrefetchScalarGridSpec(
            num_scalar_prefetch=0,
            grid=grid,
            in_specs=[
                pl.BlockSpec((2, bm), lambda i: (0, i)),   # y^T tile (lanes=batch)
                pl.BlockSpec((H, 2), lambda i: (0, 0)),    # W1, resident
                pl.BlockSpec((H, 1), lambda i: (0, 0)),    # b1, resident
                pl.BlockSpec((H, 2), lambda i: (0, 0)),    # W2, resident
                pl.BlockSpec((2, 1), lambda i: (0, 0)),    # b2, resident
            ],
            out_specs=pl.BlockSpec((2, bm), lambda i: (0, i)),
        ),
        compiler_params=pltpu.CompilerParams(
            dimension_semantics=("parallel",),             # shards tiles on v7x
        ),
        cost_estimate=cost,
    )(yt, w1, b1, w2, b2)


# ----------------------------------------------------------------------------
# Layout plumbing (do this ONCE around a solver loop, not per RHS eval)
# ----------------------------------------------------------------------------
def to_lane_dense(y):
    """(B, 2) -> (2, B_pad) with zero padding to a multiple of 128 lanes."""
    B, d = y.shape
    assert d == 2
    b_pad = _round_up(B, _LANE)
    return jnp.pad(y.T, ((0, 0), (0, b_pad - B)))


def from_lane_dense(yt, B):
    """(2, B_pad) -> (B, 2)."""
    return yt[:, :B].T


def odefunc_forward(t, y, w1, b1, w2, b2):
    """Convenience single-shot forward matching the PyTorch module signature.

    t is accepted for API parity with the PyTorch module but unused (exactly
    as in the reference forward).  y: (B, 2) -> (B, 2).
    """
    del t
    B = y.shape[0]
    yt = to_lane_dense(y)
    out_t = odefunc_rhs_lane_dense(yt, w1, b1, w2, b2)
    return from_lane_dense(out_t, B)


# ----------------------------------------------------------------------------
# Parameters & pure-JAX reference
# ----------------------------------------------------------------------------
def init_params(key, hidden=50, std=0.1):
    """Mirrors nn.init.normal_(std=0.1) / constant_(0), pre-oriented for the
    lane-dense kernel:
      w1: (H, 2)  == torch Linear(2, H).weight
      w2: (H, 2)  == torch Linear(H, 2).weight.T   ([in, out])
    """
    k1, k2 = jax.random.split(key)
    w1 = jax.random.normal(k1, (hidden, 2), dtype=jnp.float32) * std
    b1 = jnp.zeros((hidden, 1), dtype=jnp.float32)
    w2 = jax.random.normal(k2, (hidden, 2), dtype=jnp.float32) * std
    b2 = jnp.zeros((2, 1), dtype=jnp.float32)
    return w1, b1, w2, b2


def odefunc_reference(t, y, w1, b1, w2, b2):
    """Pure-JAX reference (f32 matmuls at highest precision)."""
    del t
    x = y.astype(jnp.float32) ** 3                                    # (B, 2)
    h = jnp.tanh(
        jnp.dot(x, w1.T, precision=jax.lax.Precision.HIGHEST) + b1[:, 0]
    )                                                                 # (B, H)
    out = jnp.dot(h, w2, precision=jax.lax.Precision.HIGHEST) + b2[:, 0]
    return out.astype(y.dtype)                                        # (B, 2)


if __name__ == "__main__":
    key = jax.random.PRNGKey(0)
    kp, ky = jax.random.split(key)

    H = 50
    w1, b1, w2, b2 = init_params(kp, hidden=H, std=0.1)

    B = 20                               # ode_demo-style small batch
    y = jax.random.normal(ky, (B, 2), dtype=jnp.float32)
    t = jnp.float32(0.0)                 # unused, as in the PyTorch forward

    # --- single RHS evaluation ------------------------------------------
    out = jax.block_until_ready(odefunc_forward(t, y, w1, b1, w2, b2))
    ref = odefunc_reference(t, y, w1, b1, w2, b2)
    assert out.shape == (B, 2)
    assert jnp.allclose(out, ref, atol=1e-5, rtol=1e-4), "RHS mismatch vs reference"

    # --- lane-dense solver loop (state stays (2, B_pad) throughout) -----
    dt = jnp.float32(0.05)
    yt = to_lane_dense(y)                # pad/transpose ONCE
    y_ref = y
    for _ in range(4):                   # a few explicit-Euler steps
        yt = yt + dt * odefunc_rhs_lane_dense(yt, w1, b1, w2, b2)
        y_ref = y_ref + dt * odefunc_reference(t, y_ref, w1, b1, w2, b2)
    y_final = jax.block_until_ready(from_lane_dense(yt, B))
    assert jnp.allclose(y_final, y_ref, atol=1e-5, rtol=1e-4), (
        "integration mismatch vs reference"
    )

    print("KERNEL_OK")
</pallas_src>

<mosaic_0001>
module attributes {stable_mosaic.version = 11 : i64} {
  func.func @_odefunc_kernel(%arg0: i32, %arg1: memref<2x128xf32, #tpu.memory_space<vmem>>, %arg2: memref<50x2xf32, #tpu.memory_space<vmem>>, %arg3: memref<50x1xf32, #tpu.memory_space<vmem>>, %arg4: memref<50x2xf32, #tpu.memory_space<vmem>>, %arg5: memref<2x1xf32, #tpu.memory_space<vmem>>, %arg6: memref<2x128xf32, #tpu.memory_space<vmem>>) attributes {dimension_semantics = [#tpu.dimension_semantics<parallel>], iteration_bounds = array<i64: 1>, scalar_prefetch = 0 : i64, scratch_operands = 0 : i64, tpu.core_type = #tpu.core_type<tc>, window_params = [{transform_indices = @transform_0, window_bounds = array<i64: 2, 128>}, {pipeline_mode = #tpu.pipeline_mode<synchronous>, transform_indices = @transform_1, window_bounds = array<i64: 50, 2>}, {pipeline_mode = #tpu.pipeline_mode<synchronous>, transform_indices = @transform_2, window_bounds = array<i64: 50, 1>}, {pipeline_mode = #tpu.pipeline_mode<synchronous>, transform_indices = @transform_3, window_bounds = array<i64: 50, 2>}, {pipeline_mode = #tpu.pipeline_mode<synchronous>, transform_indices = @transform_4, window_bounds = array<i64: 2, 1>}, {transform_indices = @transform_5, window_bounds = array<i64: 2, 128>}]} {
    %c0 = arith.constant 0 : index
    %c0_0 = arith.constant 0 : index
    %0 = vector.load %arg1[%c0, %c0_0] : memref<2x128xf32, #tpu.memory_space<vmem>>, vector<2x128xf32>
    %1 = arith.mulf %0, %0 : vector<2x128xf32>
    %2 = arith.mulf %1, %0 : vector<2x128xf32>
    %c0_1 = arith.constant 0 : index
    %c0_2 = arith.constant 0 : index
    %3 = vector.load %arg2[%c0_1, %c0_2] : memref<50x2xf32, #tpu.memory_space<vmem>>, vector<50x2xf32>
    %c0_3 = arith.constant 0 : index
    %c0_4 = arith.constant 0 : index
    %4 = vector.load %arg3[%c0_3, %c0_4] : memref<50x1xf32, #tpu.memory_space<vmem>>, vector<50x1xf32>
    %5 = vector.extract_strided_slice %3 {offsets = [0, 0], sizes = [50, 1], strides = [1, 1]} : vector<50x2xf32> to vector<50x1xf32>
    %6 = vector.extract_strided_slice %2 {offsets = [0, 0], sizes = [1, 128], strides = [1, 1]} : vector<2x128xf32> to vector<1x128xf32>
    %7 = vector.broadcast %5 : vector<50x1xf32> to vector<50x128xf32>
    %8 = vector.broadcast %6 : vector<1x128xf32> to vector<50x128xf32>
    %9 = arith.mulf %7, %8 : vector<50x128xf32>
    %10 = vector.extract_strided_slice %3 {offsets = [0, 1], sizes = [50, 1], strides = [1, 1]} : vector<50x2xf32> to vector<50x1xf32>
    %11 = vector.extract_strided_slice %2 {offsets = [1, 0], sizes = [1, 128], strides = [1, 1]} : vector<2x128xf32> to vector<1x128xf32>
    %12 = vector.broadcast %10 : vector<50x1xf32> to vector<50x128xf32>
    %13 = vector.broadcast %11 : vector<1x128xf32> to vector<50x128xf32>
    %14 = arith.mulf %12, %13 : vector<50x128xf32>
    %15 = arith.addf %9, %14 : vector<50x128xf32>
    %16 = vector.broadcast %4 : vector<50x1xf32> to vector<50x128xf32>
    %17 = arith.addf %15, %16 : vector<50x128xf32>
    %18 = math.tanh %17 : vector<50x128xf32>
    %c0_5 = arith.constant 0 : index
    %c0_6 = arith.constant 0 : index
    %19 = vector.load %arg4[%c0_5, %c0_6] : memref<50x2xf32, #tpu.memory_space<vmem>>, vector<50x2xf32>
    %c0_7 = arith.constant 0 : index
    %c0_8 = arith.constant 0 : index
    %20 = vector.load %arg5[%c0_7, %c0_8] : memref<2x1xf32, #tpu.memory_space<vmem>>, vector<2x1xf32>
    %21 = vector.extract_strided_slice %19 {offsets = [0, 0], sizes = [50, 1], strides = [1, 1]} : vector<50x2xf32> to vector<50x1xf32>
    %22 = vector.broadcast %21 : vector<50x1xf32> to vector<50x128xf32>
    %23 = arith.mulf %22, %18 : vector<50x128xf32>
    %cst = arith.constant dense<0.000000e+00> : vector<128xf32>
    %24 = vector.multi_reduction <add>, %23, %cst [0] : vector<50x128xf32> to vector<128xf32>
    %25 = vector.shape_cast %24 : vector<128xf32> to vector<1x128xf32>
    %26 = vector.extract_strided_slice %20 {offsets = [0, 0], sizes = [1, 1], strides = [1, 1]} : vector<2x1xf32> to vector<1x1xf32>
    %27 = vector.broadcast %26 : vector<1x1xf32> to vector<1x128xf32>
    %28 = arith.addf %25, %27 : vector<1x128xf32>
    %c0_9 = arith.constant 0 : index
    %c0_10 = arith.constant 0 : index
    %29 = vector.load %arg6[%c0_9, %c0_10] : memref<2x128xf32, #tpu.memory_space<vmem>>, vector<1x128xf32>
    tpu.vector_store %arg6[%c0_9, %c0_10], %28 {strides = array<i32>} : memref<2x128xf32, #tpu.memory_space<vmem>>, vector<1x128xf32>,
    %30 = vector.extract_strided_slice %19 {offsets = [0, 1], sizes = [50, 1], strides = [1, 1]} : vector<50x2xf32> to vector<50x1xf32>
    %31 = vector.broadcast %30 : vector<50x1xf32> to vector<50x128xf32>
    %32 = arith.mulf %31, %18 : vector<50x128xf32>
    %cst_11 = arith.constant dense<0.000000e+00> : vector<128xf32>
    %33 = vector.multi_reduction <add>, %32, %cst_11 [0] : vector<50x128xf32> to vector<128xf32>
    %34 = vector.shape_cast %33 : vector<128xf32> to vector<1x128xf32>
    %35 = vector.extract_strided_slice %20 {offsets = [1, 0], sizes = [1, 1], strides = [1, 1]} : vector<2x1xf32> to vector<1x1xf32>
    %36 = vector.broadcast %35 : vector<1x1xf32> to vector<1x128xf32>
    %37 = arith.addf %34, %36 : vector<1x128xf32>
    %c1 = arith.constant 1 : index
    %c0_12 = arith.constant 0 : index
    %38 = vector.load %arg6[%c1, %c0_12] : memref<2x128xf32, #tpu.memory_space<vmem>>, vector<1x128xf32>
    tpu.vector_store %arg6[%c1, %c0_12], %37 {strides = array<i32>} : memref<2x128xf32, #tpu.memory_space<vmem>>, vector<1x128xf32>,
    return
  }
  func.func @transform_0(%arg0: i32) -> (i32, i32) {
    %c0_i32 = arith.constant 0 : i32
    %c0_i32_0 = arith.constant 0 : i32
    return %c0_i32, %arg0 : i32, i32
  }
  func.func @transform_1(%arg0: i32) -> (i32, i32) {
    %c0_i32 = arith.constant 0 : i32
    %c0_i32_0 = arith.constant 0 : i32
    %c0_i32_1 = arith.constant 0 : i32
    return %c0_i32, %c0_i32_0 : i32, i32
  }
  func.func @transform_2(%arg0: i32) -> (i32, i32) {
    %c0_i32 = arith.constant 0 : i32
    %c0_i32_0 = arith.constant 0 : i32
    %c0_i32_1 = arith.constant 0 : i32
    return %c0_i32, %c0_i32_0 : i32, i32
  }
  func.func @transform_3(%arg0: i32) -> (i32, i32) {
    %c0_i32 = arith.constant 0 : i32
    %c0_i32_0 = arith.constant 0 : i32
    %c0_i32_1 = arith.constant 0 : i32
    return %c0_i32, %c0_i32_0 : i32, i32
  }
  func.func @transform_4(%arg0: i32) -> (i32, i32) {
    %c0_i32 = arith.constant 0 : i32
    %c0_i32_0 = arith.constant 0 : i32
    %c0_i32_1 = arith.constant 0 : i32
    return %c0_i32, %c0_i32_0 : i32, i32
  }
  func.func @transform_5(%arg0: i32) -> (i32, i32) {
    %c0_i32 = arith.constant 0 : i32
    %c0_i32_0 = arith.constant 0 : i32
    return %c0_i32, %arg0 : i32, i32
  }
}

</mosaic_0001>

<llo_original>
// kernel: tpu_custom_call.1
$region0: #{tpu_custom_call.1}
  #allocation0 [shape = 'u32[]', space=smem, size = 0x4, offset = 0x4, fixed_abs, tag = 'smem constant byte address 0x4 - core index']
  #allocation1 [shape = 'u32[72,128]{1,0:T(1,128)}', space=vmem, size = 0x9000, scoped, tag = 'internal scratch']
  %s0 = inlined_call_operand.vmem [shape: f32[2,128], index: 0, kind: input, shape index: {}]
  %s1 = inlined_call_operand.vmem [shape: f32[50,2], index: 1, kind: input, shape index: {}]
  %s2 = inlined_call_operand.vmem [shape: f32[50,1], index: 2, kind: input, shape index: {}]
  %s3 = inlined_call_operand.vmem [shape: f32[50,2], index: 3, kind: input, shape index: {}]
  %s4 = inlined_call_operand.vmem [shape: f32[2,1], index: 4, kind: input, shape index: {}]
  %s5 = inlined_call_operand.hbm [shape: f32[2,128], index: 5, kind: output, shape index: {}]
  %s6 = sld [smem:[#allocation0]]
  $region30: #{tpu_custom_call.1} parent=0
    _
  %s8 = ssub.s32 1, %s6
  %s9 = scalar_select 0, %s8, %s6
  $region1: #{tpu_custom_call.1} parent=0
    #allocation2 [shape = 'u8[1024]{0}', space=vmem, size = 0x400, scoped, tag = 'output window, operand 0, single buffered']
    #allocation3 [shape = 's32[1]{0}', space=sflag, size = 0x4, scoped, tag = 'scoped memory for tpu_custom_call.1']
    %10 = vsyncpa [#allocation3], 0
    // Predicated region
    $region2: #{tpu_custom_call.1} parent=1 // pred_check
      _
    $region3: #{tpu_custom_call.1} parent=1 // pred_check_branch
      %12 = sbr.rel (0) target = $region5
    $region4: #{tpu_custom_call.1} parent=1 // pred_region
      _
    $region5: #{tpu_custom_call.1} parent=1 // pred_fallthru
      _
    // Predicated region
    $region6: #{tpu_custom_call.1} parent=1 // pred_check
      _
    $region7: #{tpu_custom_call.1} parent=1 // pred_check_branch
      %14 = sbr.rel (0) target = $region9
    $region8: #{tpu_custom_call.1} parent=1 // pred_region
      _
    $region9: #{tpu_custom_call.1} parent=1 // pred_fallthru
      _
    // Predicated region
    $region10: #{tpu_custom_call.1} parent=1 // pred_check
      _
    $region11: #{tpu_custom_call.1} parent=1 // pred_check_branch
      %16 = sbr.rel (0) target = $region13
    $region12: #{tpu_custom_call.1} parent=1 // pred_region
      _
    $region13: #{tpu_custom_call.1} parent=1 // pred_fallthru
      _
    // Predicated region
    $region14: #{tpu_custom_call.1} parent=1 // pred_check
      _
    $region15: #{tpu_custom_call.1} parent=1 // pred_check_branch
      %18 = sbr.rel (0) target = $region17
    $region16: #{tpu_custom_call.1} parent=1 // pred_region
      _
    $region17: #{tpu_custom_call.1} parent=1 // pred_fallthru
      _
    // Predicated region
    $region18: #{tpu_custom_call.1} parent=1 // pred_check
      _
    $region19: #{tpu_custom_call.1} parent=1 // pred_check_branch
      %20 = sbr.rel (0) target = $region21
    $region20: #{tpu_custom_call.1} parent=1 // pred_region
      _
    $region21: #{tpu_custom_call.1} parent=1 // pred_fallthru
      _
    %v21 = vld [vmem:[%s0] sm:$0x3]
    %v22 = vmul.f32 %v21, %v21
    %v23 = vmul.f32 %v22, %v21
    %v24 = vld [vmem:[%s1] sm:$0xff]
    %v25 = vld [vmem:[%s1 + $0x8] sm:$0xff]
    %v26 = vld [vmem:[%s1 + $0x10] sm:$0xff]
    %v27 = vld [vmem:[%s1 + $0x18] sm:$0xff]
    %v28 = vld [vmem:[%s1 + $0x20] sm:$0xff]
    %v29 = vld [vmem:[%s1 + $0x28] sm:$0xff]
    %v30 = vld [vmem:[%s1 + $0x30] sm:$0x3]
    %v31 = vld [vmem:[%s2] sm:$0xff]
    %v32 = vld [vmem:[%s2 + $0x8] sm:$0xff]
    %v33 = vld [vmem:[%s2 + $0x10] sm:$0xff]
    %v34 = vld [vmem:[%s2 + $0x18] sm:$0xff]
    %v35 = vld [vmem:[%s2 + $0x20] sm:$0xff]
    %v36 = vld [vmem:[%s2 + $0x28] sm:$0xff]
    %v37 = vld [vmem:[%s2 + $0x30] sm:$0x3]
    %39 = vset.pattern.permute.xlu0 0
    %40 = vperm.xlu0 %39, %v24
    %v41 = vpop.permute.xlu0 %40
    %44 = vset.pattern.permute.xlu0 0
    %45 = vperm.xlu0 %44, %v25
    %v46 = vpop.permute.xlu0 %45
    %49 = vset.pattern.permute.xlu0 0
    %50 = vperm.xlu0 %49, %v26
    %v51 = vpop.permute.xlu0 %50
    %54 = vset.pattern.permute.xlu0 0
    %55 = vperm.xlu0 %54, %v27
    %v56 = vpop.permute.xlu0 %55
    %59 = vset.pattern.permute.xlu0 0
    %60 = vperm.xlu0 %59, %v28
    %v61 = vpop.permute.xlu0 %60
    %64 = vset.pattern.permute.xlu0 0
    %65 = vperm.xlu0 %64, %v29
    %v66 = vpop.permute.xlu0 %65
    %69 = vset.pattern.permute.xlu0 0
    %70 = vperm.xlu0 %69, %v30
    %v71 = vpop.permute.xlu0 %70
    %v73 = vperm.slane %v23, 0
    %v74 = vmul.f32 %v41, %v73
    %v75 = vmul.f32 %v46, %v73
    %v76 = vmul.f32 %v51, %v73
    %v77 = vmul.f32 %v56, %v73
    %v78 = vmul.f32 %v61, %v73
    %v79 = vmul.f32 %v66, %v73
    %v80 = vmul.f32 %v71, %v73
    %81 = vset.pattern.permute.xlu0 1
    %82 = vperm.xlu0 %81, %v24
    %v83 = vpop.permute.xlu0 %82
    %85 = vset.pattern.permute.xlu0 1
    %86 = vperm.xlu0 %85, %v25
    %v87 = vpop.permute.xlu0 %86
    %89 = vset.pattern.permute.xlu0 1
    %90 = vperm.xlu0 %89, %v26
    %v91 = vpop.permute.xlu0 %90
    %93 = vset.pattern.permute.xlu0 1
    %94 = vperm.xlu0 %93, %v27
    %v95 = vpop.permute.xlu0 %94
    %97 = vset.pattern.permute.xlu0 1
    %98 = vperm.xlu0 %97, %v28
    %v99 = vpop.permute.xlu0 %98
    %101 = vset.pattern.permute.xlu0 1
    %102 = vperm.xlu0 %101, %v29
    %v103 = vpop.permute.xlu0 %102
    %105 = vset.pattern.permute.xlu0 1
    %106 = vperm.xlu0 %105, %v30
    %v107 = vpop.permute.xlu0 %106
    %v109 = vperm.slane %v23, 1
    %v110 = vmul.f32 %v83, %v109
    %v111 = vmul.f32 %v87, %v109
    %v112 = vmul.f32 %v91, %v109
    %v113 = vmul.f32 %v95, %v109
    %v114 = vmul.f32 %v99, %v109
    %v115 = vmul.f32 %v103, %v109
    %v116 = vmul.f32 %v107, %v109
    %v117 = vadd.f32 %v74, %v110
    %v118 = vadd.f32 %v75, %v111
    %v119 = vadd.f32 %v76, %v112
    %v120 = vadd.f32 %v77, %v113
    %v121 = vadd.f32 %v78, %v114
    %v122 = vadd.f32 %v79, %v115
    %v123 = vadd.f32 %v80, %v116
    %125 = vset.pattern.permute.xlu0 0
    %126 = vperm.xlu0 %125, %v31
    %v127 = vpop.permute.xlu0 %126
    %130 = vset.pattern.permute.xlu0 0
    %131 = vperm.xlu0 %130, %v32
    %v132 = vpop.permute.xlu0 %131
    %135 = vset.pattern.permute.xlu0 0
    %136 = vperm.xlu0 %135, %v33
    %v137 = vpop.permute.xlu0 %136
    %140 = vset.pattern.permute.xlu0 0
    %141 = vperm.xlu0 %140, %v34
    %v142 = vpop.permute.xlu0 %141
    %145 = vset.pattern.permute.xlu0 0
    %146 = vperm.xlu0 %145, %v35
    %v147 = vpop.permute.xlu0 %146
    %150 = vset.pattern.permute.xlu0 0
    %151 = vperm.xlu0 %150, %v36
    %v152 = vpop.permute.xlu0 %151
    %155 = vset.pattern.permute.xlu0 0
    %156 = vperm.xlu0 %155, %v37
    %v157 = vpop.permute.xlu0 %156
    %v159 = vadd.f32 %v117, %v127
    %v160 = vadd.f32 %v118, %v132
    %v161 = vadd.f32 %v119, %v137
    %v162 = vadd.f32 %v120, %v142
    %v163 = vadd.f32 %v121, %v147
    %v164 = vadd.f32 %v122, %v152
    %v165 = vadd.f32 %v123, %v157
    %v166 = vtanh.pop %v159
    %v167 = vtanh.pop %v160
    %v168 = vtanh.pop %v161
    %v169 = vtanh.pop %v162
    %v170 = vtanh.pop %v163
    %v171 = vtanh.pop %v164
    %v172 = vtanh.pop %v165
    %v173 = vld [vmem:[%s3] sm:$0xff]
    %v174 = vld [vmem:[%s3 + $0x8] sm:$0xff]
    %v175 = vld [vmem:[%s3 + $0x10] sm:$0xff]
    %v176 = vld [vmem:[%s3 + $0x18] sm:$0xff]
    %v177 = vld [vmem:[%s3 + $0x20] sm:$0xff]
    %v178 = vld [vmem:[%s3 + $0x28] sm:$0xff]
    %v179 = vld [vmem:[%s3 + $0x30] sm:$0x3]
    %v180 = vld [vmem:[%s4] sm:$0x3]
    %182 = vset.pattern.permute.xlu0 0
    %183 = vperm.xlu0 %182, %v173
    %v184 = vpop.permute.xlu0 %183
    %187 = vset.pattern.permute.xlu0 0
    %188 = vperm.xlu0 %187, %v174
    %v189 = vpop.permute.xlu0 %188
    %192 = vset.pattern.permute.xlu0 0
    %193 = vperm.xlu0 %192, %v175
    %v194 = vpop.permute.xlu0 %193
    %197 = vset.pattern.permute.xlu0 0
    %198 = vperm.xlu0 %197, %v176
    %v199 = vpop.permute.xlu0 %198
    %202 = vset.pattern.permute.xlu0 0
    %203 = vperm.xlu0 %202, %v177
    %v204 = vpop.permute.xlu0 %203
    %207 = vset.pattern.permute.xlu0 0
    %208 = vperm.xlu0 %207, %v178
    %v209 = vpop.permute.xlu0 %208
    %212 = vset.pattern.permute.xlu0 0
    %213 = vperm.xlu0 %212, %v179
    %v214 = vpop.permute.xlu0 %213
    %v216 = vmul.f32 %v184, %v166
    %v217 = vmul.f32 %v189, %v167
    %v218 = vmul.f32 %v194, %v168
    %v219 = vmul.f32 %v199, %v169
    %v220 = vmul.f32 %v204, %v170
    %v221 = vmul.f32 %v209, %v171
    %v222 = vmul.f32 %v214, %v172
    %v223 = vadd.f32 %v216, %v217
    %v224 = vadd.f32 %v223, %v218
    %v225 = vadd.f32 %v224, %v219
    %v226 = vadd.f32 %v225, %v220
    %v227 = vadd.f32 %v226, %v221
    %vm228 = vcmask 1041408
    %v229 = vsel %vm228, %v222, 0.0
    %v230 = vadd.f32 %v227, %v229
    %v231 = vrot.slane %v230, 4
    %v232 = vadd.f32 %v230, %v231
    %v233 = vrot.slane %v232, 2
    %v234 = vadd.f32 %v232, %v233
    %v235 = vrot.slane %v234, 1
    %v236 = vadd.f32 %v234, %v235
    %238 = vset.pattern.permute.xlu0 0
    %239 = vperm.xlu0 %238, %v180
    %v240 = vpop.permute.xlu0 %239
    %v242 = vadd.f32 %v236, %v240
    %243 = vst [vmem:[#allocation2] sm:$0x1] %v242
    %244 = vset.pattern.permute.xlu0 1
    %245 = vperm.xlu0 %244, %v173
    %v246 = vpop.permute.xlu0 %245
    %248 = vset.pattern.permute.xlu0 1
    %249 = vperm.xlu0 %248, %v174
    %v250 = vpop.permute.xlu0 %249
    %252 = vset.pattern.permute.xlu0 1
    %253 = vperm.xlu0 %252, %v175
    %v254 = vpop.permute.xlu0 %253
    %256 = vset.pattern.permute.xlu0 1
    %257 = vperm.xlu0 %256, %v176
    %v258 = vpop.permute.xlu0 %257
    %260 = vset.pattern.permute.xlu0 1
    %261 = vperm.xlu0 %260, %v177
    %v262 = vpop.permute.xlu0 %261
    %264 = vset.pattern.permute.xlu0 1
    %265 = vperm.xlu0 %264, %v178
    %v266 = vpop.permute.xlu0 %265
    %268 = vset.pattern.permute.xlu0 1
    %269 = vperm.xlu0 %268, %v179
    %v270 = vpop.permute.xlu0 %269
    %v272 = vmul.f32 %v246, %v166
    %v273 = vmul.f32 %v250, %v167
    %v274 = vmul.f32 %v254, %v168
    %v275 = vmul.f32 %v258, %v169
    %v276 = vmul.f32 %v262, %v170
    %v277 = vmul.f32 %v266, %v171
    %v278 = vmul.f32 %v270, %v172
    %v279 = vadd.f32 %v272, %v273
    %v280 = vadd.f32 %v279, %v274
    %v281 = vadd.f32 %v280, %v275
    %v282 = vadd.f32 %v281, %v276
    %v283 = vadd.f32 %v282, %v277
    %v284 = vsel %vm228, %v278, 0.0
    %v285 = vadd.f32 %v283, %v284
    %v286 = vrot.slane %v285, 4
    %v287 = vadd.f32 %v285, %v286
    %v288 = vrot.slane %v287, 2
    %v289 = vadd.f32 %v287, %v288
    %v290 = vrot.slane %v289, 1
    %v291 = vadd.f32 %v289, %v290
    %v292 = vadd.f32 %v291, %v240
    %293 = vst [vmem:[#allocation2] sm:$0x2] %v292
    // Predicated region
    $region22: #{tpu_custom_call.1} parent=1 // pred_check
      _
    $region23: #{tpu_custom_call.1} parent=1 // pred_check_branch
      %295 = sbr.rel (0) target = $region25
    $region24: #{tpu_custom_call.1} parent=1 // pred_region
      %297 = vsyncadd [#allocation3], 0
      %s299 = sshll.u32 [#allocation2], 4
      %s300 = int_to_ptr.vmem [resolvable:$true] %s299
      %s301 = sshll.u32 %s5, 4
      %s302 = int_to_ptr.hbm [resolvable:$true] %s301
      %304 = dma.vmem_to_hbm [thread:$0]  %s300, 32, %s302, [#allocation3]
    $region25: #{tpu_custom_call.1} parent=1 // pred_fallthru
      _
    // Predicated region
    $region26: #{tpu_custom_call.1} parent=1 // pred_check
      _
    $region27: #{tpu_custom_call.1} parent=1 // pred_check_branch
      %306 = sbr.rel (0) target = $region29
    $region28: #{tpu_custom_call.1} parent=1 // pred_region
      %308 = dma.done [#allocation3], 32
    $region29: #{tpu_custom_call.1} parent=1 // pred_fallthru
      _
    %309 = vsyncpa [#allocation3], 1

</llo_original>
